<compile_context>
chip_gen: v5e
topology: v5e:2x2
jax: 0.10.0
libtpu: 0.0.40
codegen_flags: <defaults>
</compile_context>

<pallas_src>
import functools

import jax
import jax.numpy as jnp
from jax.experimental import pallas as pl
from jax.experimental.pallas import tpu as pltpu


def char_lstm_kernel(emb_ref, h0_ref, c0_ref,
                     wx_ref, wh_ref, b_ref,
                     wout_ref, bout_ref,
                     out_ref, h_ref, c_ref):
    """Whole-sequence LSTM recurrence; everything stays in VMEM / vregs."""
    T = emb_ref.shape[0]
    H = h0_ref.shape[1]

    # x-side contribution for all timesteps in one MXU push: (T, 4H).
    # At T=8, H=32 this is exactly one (8,128) f32 vreg — keep it as a value,
    # not a VMEM scratch, so per-step slicing is free addressing.
    xw = jnp.dot(emb_ref[...], wx_ref[...],
                 preferred_element_type=jnp.float32) + b_ref[...]

    # Hoist the recurrent weight load out of the loop.
    wh = wh_ref[...]

    h = h0_ref[...]                                   # (1, H)
    c = c0_ref[...]                                   # (1, H)

    hs = []
    for t in range(T):                                # static, fully unrolled
        gates = xw[t:t + 1, :] + jnp.dot(h, wh,
                                         preferred_element_type=jnp.float32)
        # Two full-width EUP passes instead of four quarter-width ones.
        sig = jax.nn.sigmoid(gates)                   # (1, 4H)
        th = jnp.tanh(gates)                          # (1, 4H)

        f = sig[:, 0 * H:1 * H]
        i = sig[:, 1 * H:2 * H]
        o = sig[:, 2 * H:3 * H]
        c_tilde = th[:, 3 * H:4 * H]

        c = f * c + i * c_tilde
        h = o * jnp.tanh(c)
        hs.append(h)                                  # register-resident

    h_ref[...] = h
    c_ref[...] = c

    # Stack hidden states (T, H) and do one batched output projection with a
    # single lane-dense (128-wide) store.
    h_all = jnp.concatenate(hs, axis=0)
    out_ref[...] = jnp.dot(h_all, wout_ref[...],
                           preferred_element_type=jnp.float32) + bout_ref[...]


def prepare_params(params):
    """One-time fusion of the four gate Linears + output-projection padding.

    Hoisted out of the forward path so the per-call work is only the gather,
    the pallas_call and a tiny slice.
    """
    emb = params['embedding'].astype(jnp.float32)                 # (n_chars, E)
    E = emb.shape[1]
    H = params['wf'].shape[1]
    n_chars = params['wout'].shape[1]

    # concat([x, h]) @ W == x @ Wx + h @ Wh  for W = [[Wx], [Wh]].
    w_cat = jnp.concatenate(
        [params['wf'], params['wi'], params['wo'], params['wc']],
        axis=1).astype(jnp.float32)                               # (E+H, 4H)
    wx = w_cat[:E, :]                                             # (E, 4H)
    wh = w_cat[E:, :]                                             # (H, 4H)
    b = jnp.concatenate(
        [params['bf'], params['bi'], params['bo'], params['bc']]
    )[None, :].astype(jnp.float32)                                # (1, 4H)

    # Pad the output projection to a multiple of 128 lanes so the final store
    # is an unmasked lane-dense vst.
    n_pad = ((n_chars + 127) // 128) * 128
    wout = jnp.zeros((H, n_pad), jnp.float32)
    wout = wout.at[:, :n_chars].set(params['wout'].astype(jnp.float32))
    bout = jnp.zeros((1, n_pad), jnp.float32)
    bout = bout.at[0, :n_chars].set(params['bout'].astype(jnp.float32))

    return {'embedding': emb, 'wx': wx, 'wh': wh, 'b': b,
            'wout': wout, 'bout': bout, 'n_chars': n_chars}


@functools.partial(jax.jit, static_argnames=('n_chars',))
def _forward_impl(input_seq, emb_table, wx, wh, b, wout, bout,
                  hidden, cell, *, n_chars):
    # Embedding lookup (gather) is glue; the recurrent hot path is in-kernel.
    emb = emb_table[input_seq]                                    # (T, E)
    T = emb.shape[0]
    H = wh.shape[0]
    n_pad = wout.shape[1]

    vm = pl.BlockSpec(memory_space=pltpu.MemorySpace.VMEM)

    out_p, h_fin, c_fin = pl.pallas_call(
        char_lstm_kernel,
        out_shape=(jax.ShapeDtypeStruct((T, n_pad), jnp.float32),
                   jax.ShapeDtypeStruct((1, H), jnp.float32),
                   jax.ShapeDtypeStruct((1, H), jnp.float32)),
        in_specs=[vm] * 8,
        out_specs=(vm, vm, vm),
    )(emb, hidden[None, :], cell[None, :], wx, wh, b, wout, bout)

    return out_p[:, :n_chars], h_fin[0], c_fin[0]


def char_lstm_forward(input_seq, prep, hidden=None, cell=None):
    """Mirrors CharLSTM.forward(input_seq, hidden, cell)."""
    H = prep['wh'].shape[0]
    if hidden is None:
        hidden = jnp.zeros((H,), jnp.float32)
    if cell is None:
        cell = jnp.zeros((H,), jnp.float32)
    return _forward_impl(input_seq, prep['embedding'], prep['wx'], prep['wh'],
                         prep['b'], prep['wout'], prep['bout'],
                         hidden.astype(jnp.float32), cell.astype(jnp.float32),
                         n_chars=prep['n_chars'])


def ref_forward(input_seq, params, hidden, cell):
    """Pure-JAX reference mirroring the PyTorch module (full-f32 matmuls)."""
    hp = jax.lax.Precision.HIGHEST
    emb = params['embedding'][input_seq].astype(jnp.float32)
    h, c = hidden, cell
    outs = []
    for t in range(emb.shape[0]):
        x = emb[t]
        concat = jnp.concatenate([x, h])
        f = jax.nn.sigmoid(jnp.dot(concat, params['wf'], precision=hp) + params['bf'])
        i = jax.nn.sigmoid(jnp.dot(concat, params['wi'], precision=hp) + params['bi'])
        o = jax.nn.sigmoid(jnp.dot(concat, params['wo'], precision=hp) + params['bo'])
        c_tilde = jnp.tanh(jnp.dot(concat, params['wc'], precision=hp) + params['bc'])
        c = f * c + i * c_tilde
        h = o * jnp.tanh(c)
        outs.append(jnp.dot(h, params['wout'], precision=hp) + params['bout'])
    return jnp.stack(outs), h, c


def init_params(key, n_chars, embedding_size, hidden_size):
    concat = hidden_size + embedding_size
    ks = jax.random.split(key, 11)
    u = lambda k, shape, s: jax.random.uniform(k, shape, jnp.float32, -s, s)
    return {
        'embedding': jax.random.normal(ks[0], (n_chars, embedding_size),
                                       jnp.float32),
        'wf': u(ks[1], (concat, hidden_size), 0.2),
        'bf': u(ks[2], (hidden_size,), 0.2),
        'wi': u(ks[3], (concat, hidden_size), 0.2),
        'bi': u(ks[4], (hidden_size,), 0.2),
        'wo': u(ks[5], (concat, hidden_size), 0.2),
        'bo': u(ks[6], (hidden_size,), 0.2),
        'wc': u(ks[7], (concat, hidden_size), 0.2),
        'bc': u(ks[8], (hidden_size,), 0.2),
        'wout': u(ks[9], (hidden_size, n_chars), 0.2),
        'bout': u(ks[10], (n_chars,), 0.2),
    }


if __name__ == "__main__":
    n_chars, embedding_size, hidden_size, seq_len = 32, 16, 32, 8

    key = jax.random.PRNGKey(0)
    kp, kx = jax.random.split(key)
    params = init_params(kp, n_chars, embedding_size, hidden_size)
    input_seq = jax.random.randint(kx, (seq_len,), 0, n_chars, jnp.int32)

    prep = prepare_params(params)                 # one-time weight fusion
    jax.block_until_ready(prep)

    out, h, c = char_lstm_forward(input_seq, prep)
    jax.block_until_ready((out, h, c))

    # Verify against pure-JAX reference of the PyTorch semantics.
    h0 = jnp.zeros((hidden_size,), jnp.float32)
    c0 = jnp.zeros((hidden_size,), jnp.float32)
    out_ref, h_r, c_r = ref_forward(input_seq, params, h0, c0)
    assert out.shape == (seq_len, n_chars)
    assert h.shape == (hidden_size,) and c.shape == (hidden_size,)
    assert jnp.allclose(out, out_ref, atol=1e-5)
    assert jnp.allclose(h, h_r, atol=1e-5)
    assert jnp.allclose(c, c_r, atol=1e-5)

    print("KERNEL_OK")
</pallas_src>

<mosaic_0001>
module attributes {stable_mosaic.version = 11 : i64} {
  func.func @char_lstm_kernel(%arg0: memref<8x16xf32, #tpu.memory_space<vmem>>, %arg1: memref<1x32xf32, #tpu.memory_space<vmem>>, %arg2: memref<1x32xf32, #tpu.memory_space<vmem>>, %arg3: memref<16x128xf32, #tpu.memory_space<vmem>>, %arg4: memref<32x128xf32, #tpu.memory_space<vmem>>, %arg5: memref<1x128xf32, #tpu.memory_space<vmem>>, %arg6: memref<32x128xf32, #tpu.memory_space<vmem>>, %arg7: memref<1x128xf32, #tpu.memory_space<vmem>>, %arg8: memref<8x128xf32, #tpu.memory_space<vmem>>, %arg9: memref<1x32xf32, #tpu.memory_space<vmem>>, %arg10: memref<1x32xf32, #tpu.memory_space<vmem>>) attributes {dimension_semantics = [], scalar_prefetch = 0 : i64, scratch_operands = 0 : i64, tpu.core_type = #tpu.core_type<tc>} {
    %c0 = arith.constant 0 : index
    %c0_0 = arith.constant 0 : index
    %0 = vector.load %arg0[%c0, %c0_0] : memref<8x16xf32, #tpu.memory_space<vmem>>, vector<8x16xf32>
    %c0_1 = arith.constant 0 : index
    %c0_2 = arith.constant 0 : index
    %1 = vector.load %arg3[%c0_1, %c0_2] : memref<16x128xf32, #tpu.memory_space<vmem>>, vector<16x128xf32>
    %cst = arith.constant dense<0.000000e+00> : vector<8x128xf32>
    %2 = tpu.matmul %0, %1, %cst {dimension_numbers = #tpu.dot_dimension_numbers<[1], [0], [0], [1], [0, 0, 1, 1], [], []>} : vector<8x16xf32>, vector<16x128xf32>, vector<8x128xf32> -> vector<8x128xf32>
    %c0_3 = arith.constant 0 : index
    %c0_4 = arith.constant 0 : index
    %3 = vector.load %arg5[%c0_3, %c0_4] : memref<1x128xf32, #tpu.memory_space<vmem>>, vector<1x128xf32>
    %4 = vector.broadcast %3 : vector<1x128xf32> to vector<8x128xf32>
    %5 = arith.addf %2, %4 : vector<8x128xf32>
    %c0_5 = arith.constant 0 : index
    %c0_6 = arith.constant 0 : index
    %6 = vector.load %arg4[%c0_5, %c0_6] : memref<32x128xf32, #tpu.memory_space<vmem>>, vector<32x128xf32>
    %c0_7 = arith.constant 0 : index
    %c0_8 = arith.constant 0 : index
    %7 = vector.load %arg1[%c0_7, %c0_8] : memref<1x32xf32, #tpu.memory_space<vmem>>, vector<1x32xf32>
    %c0_9 = arith.constant 0 : index
    %c0_10 = arith.constant 0 : index
    %8 = vector.load %arg2[%c0_9, %c0_10] : memref<1x32xf32, #tpu.memory_space<vmem>>, vector<1x32xf32>
    %9 = vector.extract_strided_slice %5 {offsets = [0, 0], sizes = [1, 128], strides = [1, 1]} : vector<8x128xf32> to vector<1x128xf32>
    %cst_11 = arith.constant dense<0.000000e+00> : vector<1x128xf32>
    %10 = tpu.matmul %7, %6, %cst_11 {dimension_numbers = #tpu.dot_dimension_numbers<[1], [0], [0], [1], [0, 0, 1, 1], [], []>} : vector<1x32xf32>, vector<32x128xf32>, vector<1x128xf32> -> vector<1x128xf32>
    %11 = arith.addf %9, %10 : vector<1x128xf32>
    %12 = arith.negf %11 : vector<1x128xf32>
    %13 = math.exp %12 : vector<1x128xf32>
    %cst_12 = arith.constant 1.000000e+00 : f32
    %14 = vector.broadcast %cst_12 : f32 to vector<1x128xf32>
    %15 = arith.addf %14, %13 : vector<1x128xf32>
    %16 = arith.divf %14, %15 : vector<1x128xf32>
    %17 = math.tanh %11 : vector<1x128xf32>
    %18 = vector.extract_strided_slice %16 {offsets = [0, 0], sizes = [1, 32], strides = [1, 1]} : vector<1x128xf32> to vector<1x32xf32>
    %19 = vector.extract_strided_slice %16 {offsets = [0, 32], sizes = [1, 32], strides = [1, 1]} : vector<1x128xf32> to vector<1x32xf32>
    %20 = vector.extract_strided_slice %16 {offsets = [0, 64], sizes = [1, 32], strides = [1, 1]} : vector<1x128xf32> to vector<1x32xf32>
    %21 = vector.extract_strided_slice %17 {offsets = [0, 96], sizes = [1, 32], strides = [1, 1]} : vector<1x128xf32> to vector<1x32xf32>
    %22 = arith.mulf %18, %8 : vector<1x32xf32>
    %23 = arith.mulf %19, %21 : vector<1x32xf32>
    %24 = arith.addf %22, %23 : vector<1x32xf32>
    %25 = math.tanh %24 : vector<1x32xf32>
    %26 = arith.mulf %20, %25 : vector<1x32xf32>
    %27 = vector.extract_strided_slice %5 {offsets = [1, 0], sizes = [1, 128], strides = [1, 1]} : vector<8x128xf32> to vector<1x128xf32>
    %cst_13 = arith.constant dense<0.000000e+00> : vector<1x128xf32>
    %28 = tpu.matmul %26, %6, %cst_13 {dimension_numbers = #tpu.dot_dimension_numbers<[1], [0], [0], [1], [0, 0, 1, 1], [], []>} : vector<1x32xf32>, vector<32x128xf32>, vector<1x128xf32> -> vector<1x128xf32>
    %29 = arith.addf %27, %28 : vector<1x128xf32>
    %30 = arith.negf %29 : vector<1x128xf32>
    %31 = math.exp %30 : vector<1x128xf32>
    %cst_14 = arith.constant 1.000000e+00 : f32
    %32 = vector.broadcast %cst_14 : f32 to vector<1x128xf32>
    %33 = arith.addf %32, %31 : vector<1x128xf32>
    %34 = arith.divf %32, %33 : vector<1x128xf32>
    %35 = math.tanh %29 : vector<1x128xf32>
    %36 = vector.extract_strided_slice %34 {offsets = [0, 0], sizes = [1, 32], strides = [1, 1]} : vector<1x128xf32> to vector<1x32xf32>
    %37 = vector.extract_strided_slice %34 {offsets = [0, 32], sizes = [1, 32], strides = [1, 1]} : vector<1x128xf32> to vector<1x32xf32>
    %38 = vector.extract_strided_slice %34 {offsets = [0, 64], sizes = [1, 32], strides = [1, 1]} : vector<1x128xf32> to vector<1x32xf32>
    %39 = vector.extract_strided_slice %35 {offsets = [0, 96], sizes = [1, 32], strides = [1, 1]} : vector<1x128xf32> to vector<1x32xf32>
    %40 = arith.mulf %36, %24 : vector<1x32xf32>
    %41 = arith.mulf %37, %39 : vector<1x32xf32>
    %42 = arith.addf %40, %41 : vector<1x32xf32>
    %43 = math.tanh %42 : vector<1x32xf32>
    %44 = arith.mulf %38, %43 : vector<1x32xf32>
    %45 = vector.extract_strided_slice %5 {offsets = [2, 0], sizes = [1, 128], strides = [1, 1]} : vector<8x128xf32> to vector<1x128xf32>
    %cst_15 = arith.constant dense<0.000000e+00> : vector<1x128xf32>
    %46 = tpu.matmul %44, %6, %cst_15 {dimension_numbers = #tpu.dot_dimension_numbers<[1], [0], [0], [1], [0, 0, 1, 1], [], []>} : vector<1x32xf32>, vector<32x128xf32>, vector<1x128xf32> -> vector<1x128xf32>
    %47 = arith.addf %45, %46 : vector<1x128xf32>
    %48 = arith.negf %47 : vector<1x128xf32>
    %49 = math.exp %48 : vector<1x128xf32>
    %cst_16 = arith.constant 1.000000e+00 : f32
    %50 = vector.broadcast %cst_16 : f32 to vector<1x128xf32>
    %51 = arith.addf %50, %49 : vector<1x128xf32>
    %52 = arith.divf %50, %51 : vector<1x128xf32>
    %53 = math.tanh %47 : vector<1x128xf32>
    %54 = vector.extract_strided_slice %52 {offsets = [0, 0], sizes = [1, 32], strides = [1, 1]} : vector<1x128xf32> to vector<1x32xf32>
    %55 = vector.extract_strided_slice %52 {offsets = [0, 32], sizes = [1, 32], strides = [1, 1]} : vector<1x128xf32> to vector<1x32xf32>
    %56 = vector.extract_strided_slice %52 {offsets = [0, 64], sizes = [1, 32], strides = [1, 1]} : vector<1x128xf32> to vector<1x32xf32>
    %57 = vector.extract_strided_slice %53 {offsets = [0, 96], sizes = [1, 32], strides = [1, 1]} : vector<1x128xf32> to vector<1x32xf32>
    %58 = arith.mulf %54, %42 : vector<1x32xf32>
    %59 = arith.mulf %55, %57 : vector<1x32xf32>
    %60 = arith.addf %58, %59 : vector<1x32xf32>
    %61 = math.tanh %60 : vector<1x32xf32>
    %62 = arith.mulf %56, %61 : vector<1x32xf32>
    %63 = vector.extract_strided_slice %5 {offsets = [3, 0], sizes = [1, 128], strides = [1, 1]} : vector<8x128xf32> to vector<1x128xf32>
    %cst_17 = arith.constant dense<0.000000e+00> : vector<1x128xf32>
    %64 = tpu.matmul %62, %6, %cst_17 {dimension_numbers = #tpu.dot_dimension_numbers<[1], [0], [0], [1], [0, 0, 1, 1], [], []>} : vector<1x32xf32>, vector<32x128xf32>, vector<1x128xf32> -> vector<1x128xf32>
    %65 = arith.addf %63, %64 : vector<1x128xf32>
    %66 = arith.negf %65 : vector<1x128xf32>
    %67 = math.exp %66 : vector<1x128xf32>
    %cst_18 = arith.constant 1.000000e+00 : f32
    %68 = vector.broadcast %cst_18 : f32 to vector<1x128xf32>
    %69 = arith.addf %68, %67 : vector<1x128xf32>
    %70 = arith.divf %68, %69 : vector<1x128xf32>
    %71 = math.tanh %65 : vector<1x128xf32>
    %72 = vector.extract_strided_slice %70 {offsets = [0, 0], sizes = [1, 32], strides = [1, 1]} : vector<1x128xf32> to vector<1x32xf32>
    %73 = vector.extract_strided_slice %70 {offsets = [0, 32], sizes = [1, 32], strides = [1, 1]} : vector<1x128xf32> to vector<1x32xf32>
    %74 = vector.extract_strided_slice %70 {offsets = [0, 64], sizes = [1, 32], strides = [1, 1]} : vector<1x128xf32> to vector<1x32xf32>
    %75 = vector.extract_strided_slice %71 {offsets = [0, 96], sizes = [1, 32], strides = [1, 1]} : vector<1x128xf32> to vector<1x32xf32>
    %76 = arith.mulf %72, %60 : vector<1x32xf32>
    %77 = arith.mulf %73, %75 : vector<1x32xf32>
    %78 = arith.addf %76, %77 : vector<1x32xf32>
    %79 = math.tanh %78 : vector<1x32xf32>
    %80 = arith.mulf %74, %79 : vector<1x32xf32>
    %81 = vector.extract_strided_slice %5 {offsets = [4, 0], sizes = [1, 128], strides = [1, 1]} : vector<8x128xf32> to vector<1x128xf32>
    %cst_19 = arith.constant dense<0.000000e+00> : vector<1x128xf32>
    %82 = tpu.matmul %80, %6, %cst_19 {dimension_numbers = #tpu.dot_dimension_numbers<[1], [0], [0], [1], [0, 0, 1, 1], [], []>} : vector<1x32xf32>, vector<32x128xf32>, vector<1x128xf32> -> vector<1x128xf32>
    %83 = arith.addf %81, %82 : vector<1x128xf32>
    %84 = arith.negf %83 : vector<1x128xf32>
    %85 = math.exp %84 : vector<1x128xf32>
    %cst_20 = arith.constant 1.000000e+00 : f32
    %86 = vector.broadcast %cst_20 : f32 to vector<1x128xf32>
    %87 = arith.addf %86, %85 : vector<1x128xf32>
    %88 = arith.divf %86, %87 : vector<1x128xf32>
    %89 = math.tanh %83 : vector<1x128xf32>
    %90 = vector.extract_strided_slice %88 {offsets = [0, 0], sizes = [1, 32], strides = [1, 1]} : vector<1x128xf32> to vector<1x32xf32>
    %91 = vector.extract_strided_slice %88 {offsets = [0, 32], sizes = [1, 32], strides = [1, 1]} : vector<1x128xf32> to vector<1x32xf32>
    %92 = vector.extract_strided_slice %88 {offsets = [0, 64], sizes = [1, 32], strides = [1, 1]} : vector<1x128xf32> to vector<1x32xf32>
    %93 = vector.extract_strided_slice %89 {offsets = [0, 96], sizes = [1, 32], strides = [1, 1]} : vector<1x128xf32> to vector<1x32xf32>
    %94 = arith.mulf %90, %78 : vector<1x32xf32>
    %95 = arith.mulf %91, %93 : vector<1x32xf32>
    %96 = arith.addf %94, %95 : vector<1x32xf32>
    %97 = math.tanh %96 : vector<1x32xf32>
    %98 = arith.mulf %92, %97 : vector<1x32xf32>
    %99 = vector.extract_strided_slice %5 {offsets = [5, 0], sizes = [1, 128], strides = [1, 1]} : vector<8x128xf32> to vector<1x128xf32>
    %cst_21 = arith.constant dense<0.000000e+00> : vector<1x128xf32>
    %100 = tpu.matmul %98, %6, %cst_21 {dimension_numbers = #tpu.dot_dimension_numbers<[1], [0], [0], [1], [0, 0, 1, 1], [], []>} : vector<1x32xf32>, vector<32x128xf32>, vector<1x128xf32> -> vector<1x128xf32>
    %101 = arith.addf %99, %100 : vector<1x128xf32>
    %102 = arith.negf %101 : vector<1x128xf32>
    %103 = math.exp %102 : vector<1x128xf32>
    %cst_22 = arith.constant 1.000000e+00 : f32
    %104 = vector.broadcast %cst_22 : f32 to vector<1x128xf32>
    %105 = arith.addf %104, %103 : vector<1x128xf32>
    %106 = arith.divf %104, %105 : vector<1x128xf32>
    %107 = math.tanh %101 : vector<1x128xf32>
    %108 = vector.extract_strided_slice %106 {offsets = [0, 0], sizes = [1, 32], strides = [1, 1]} : vector<1x128xf32> to vector<1x32xf32>
    %109 = vector.extract_strided_slice %106 {offsets = [0, 32], sizes = [1, 32], strides = [1, 1]} : vector<1x128xf32> to vector<1x32xf32>
    %110 = vector.extract_strided_slice %106 {offsets = [0, 64], sizes = [1, 32], strides = [1, 1]} : vector<1x128xf32> to vector<1x32xf32>
    %111 = vector.extract_strided_slice %107 {offsets = [0, 96], sizes = [1, 32], strides = [1, 1]} : vector<1x128xf32> to vector<1x32xf32>
    %112 = arith.mulf %108, %96 : vector<1x32xf32>
    %113 = arith.mulf %109, %111 : vector<1x32xf32>
    %114 = arith.addf %112, %113 : vector<1x32xf32>
    %115 = math.tanh %114 : vector<1x32xf32>
    %116 = arith.mulf %110, %115 : vector<1x32xf32>
    %117 = vector.extract_strided_slice %5 {offsets = [6, 0], sizes = [1, 128], strides = [1, 1]} : vector<8x128xf32> to vector<1x128xf32>
    %cst_23 = arith.constant dense<0.000000e+00> : vector<1x128xf32>
    %118 = tpu.matmul %116, %6, %cst_23 {dimension_numbers = #tpu.dot_dimension_numbers<[1], [0], [0], [1], [0, 0, 1, 1], [], []>} : vector<1x32xf32>, vector<32x128xf32>, vector<1x128xf32> -> vector<1x128xf32>
    %119 = arith.addf %117, %118 : vector<1x128xf32>
    %120 = arith.negf %119 : vector<1x128xf32>
    %121 = math.exp %120 : vector<1x128xf32>
    %cst_24 = arith.constant 1.000000e+00 : f32
    %122 = vector.broadcast %cst_24 : f32 to vector<1x128xf32>
    %123 = arith.addf %122, %121 : vector<1x128xf32>
    %124 = arith.divf %122, %123 : vector<1x128xf32>
    %125 = math.tanh %119 : vector<1x128xf32>
    %126 = vector.extract_strided_slice %124 {offsets = [0, 0], sizes = [1, 32], strides = [1, 1]} : vector<1x128xf32> to vector<1x32xf32>
    %127 = vector.extract_strided_slice %124 {offsets = [0, 32], sizes = [1, 32], strides = [1, 1]} : vector<1x128xf32> to vector<1x32xf32>
    %128 = vector.extract_strided_slice %124 {offsets = [0, 64], sizes = [1, 32], strides = [1, 1]} : vector<1x128xf32> to vector<1x32xf32>
    %129 = vector.extract_strided_slice %125 {offsets = [0, 96], sizes = [1, 32], strides = [1, 1]} : vector<1x128xf32> to vector<1x32xf32>
    %130 = arith.mulf %126, %114 : vector<1x32xf32>
    %131 = arith.mulf %127, %129 : vector<1x32xf32>
    %132 = arith.addf %130, %131 : vector<1x32xf32>
    %133 = math.tanh %132 : vector<1x32xf32>
    %134 = arith.mulf %128, %133 : vector<1x32xf32>
    %135 = vector.extract_strided_slice %5 {offsets = [7, 0], sizes = [1, 128], strides = [1, 1]} : vector<8x128xf32> to vector<1x128xf32>
    %cst_25 = arith.constant dense<0.000000e+00> : vector<1x128xf32>
    %136 = tpu.matmul %134, %6, %cst_25 {dimension_numbers = #tpu.dot_dimension_numbers<[1], [0], [0], [1], [0, 0, 1, 1], [], []>} : vector<1x32xf32>, vector<32x128xf32>, vector<1x128xf32> -> vector<1x128xf32>
    %137 = arith.addf %135, %136 : vector<1x128xf32>
    %138 = arith.negf %137 : vector<1x128xf32>
    %139 = math.exp %138 : vector<1x128xf32>
    %cst_26 = arith.constant 1.000000e+00 : f32
    %140 = vector.broadcast %cst_26 : f32 to vector<1x128xf32>
    %141 = arith.addf %140, %139 : vector<1x128xf32>
    %142 = arith.divf %140, %141 : vector<1x128xf32>
    %143 = math.tanh %137 : vector<1x128xf32>
    %144 = vector.extract_strided_slice %142 {offsets = [0, 0], sizes = [1, 32], strides = [1, 1]} : vector<1x128xf32> to vector<1x32xf32>
    %145 = vector.extract_strided_slice %142 {offsets = [0, 32], sizes = [1, 32], strides = [1, 1]} : vector<1x128xf32> to vector<1x32xf32>
    %146 = vector.extract_strided_slice %142 {offsets = [0, 64], sizes = [1, 32], strides = [1, 1]} : vector<1x128xf32> to vector<1x32xf32>
    %147 = vector.extract_strided_slice %143 {offsets = [0, 96], sizes = [1, 32], strides = [1, 1]} : vector<1x128xf32> to vector<1x32xf32>
    %148 = arith.mulf %144, %132 : vector<1x32xf32>
    %149 = arith.mulf %145, %147 : vector<1x32xf32>
    %150 = arith.addf %148, %149 : vector<1x32xf32>
    %151 = math.tanh %150 : vector<1x32xf32>
    %152 = arith.mulf %146, %151 : vector<1x32xf32>
    %c0_27 = arith.constant 0 : index
    %c0_28 = arith.constant 0 : index
    %153 = vector.load %arg9[%c0_27, %c0_28] : memref<1x32xf32, #tpu.memory_space<vmem>>, vector<1x32xf32>
    tpu.vector_store %arg9[%c0_27, %c0_28], %152 {strides = array<i32>} : memref<1x32xf32, #tpu.memory_space<vmem>>, vector<1x32xf32>,
    %c0_29 = arith.constant 0 : index
    %c0_30 = arith.constant 0 : index
    %154 = vector.load %arg10[%c0_29, %c0_30] : memref<1x32xf32, #tpu.memory_space<vmem>>, vector<1x32xf32>
    tpu.vector_store %arg10[%c0_29, %c0_30], %150 {strides = array<i32>} : memref<1x32xf32, #tpu.memory_space<vmem>>, vector<1x32xf32>,
    %155 = tpu.concatenate %26, %44, %62, %80, %98, %116, %134, %152 in 0 : vector<1x32xf32>, vector<1x32xf32>, vector<1x32xf32>, vector<1x32xf32>, vector<1x32xf32>, vector<1x32xf32>, vector<1x32xf32>, vector<1x32xf32> -> vector<8x32xf32>
    %c0_31 = arith.constant 0 : index
    %c0_32 = arith.constant 0 : index
    %156 = vector.load %arg6[%c0_31, %c0_32] : memref<32x128xf32, #tpu.memory_space<vmem>>, vector<32x128xf32>
    %cst_33 = arith.constant dense<0.000000e+00> : vector<8x128xf32>
    %157 = tpu.matmul %155, %156, %cst_33 {dimension_numbers = #tpu.dot_dimension_numbers<[1], [0], [0], [1], [0, 0, 1, 1], [], []>} : vector<8x32xf32>, vector<32x128xf32>, vector<8x128xf32> -> vector<8x128xf32>
    %c0_34 = arith.constant 0 : index
    %c0_35 = arith.constant 0 : index
    %158 = vector.load %arg7[%c0_34, %c0_35] : memref<1x128xf32, #tpu.memory_space<vmem>>, vector<1x128xf32>
    %159 = vector.broadcast %158 : vector<1x128xf32> to vector<8x128xf32>
    %160 = arith.addf %157, %159 : vector<8x128xf32>
    %c0_36 = arith.constant 0 : index
    %c0_37 = arith.constant 0 : index
    %161 = vector.load %arg8[%c0_36, %c0_37] : memref<8x128xf32, #tpu.memory_space<vmem>>, vector<8x128xf32>
    tpu.vector_store %arg8[%c0_36, %c0_37], %160 {strides = array<i32>} : memref<8x128xf32, #tpu.memory_space<vmem>>, vector<8x128xf32>,
    return
  }
}

</mosaic_0001>

<llo_original>
// kernel: _forward_impl.1
$region0: #{_forward_impl.1}
  #allocation0 [shape = 'u32[]', space=smem, size = 0x4, offset = 0x4, fixed_abs, tag = 'smem constant byte address 0x4 - core index']
  #allocation1 [shape = 'u32[72,128]{1,0:T(1,128)}', space=vmem, size = 0x9000, scoped, tag = 'internal scratch']
  %s0 = inlined_call_operand.vmem [shape: f32[8,16], index: 0, kind: input, shape index: {}]
  %s1 = inlined_call_operand.vmem [shape: f32[1,32], index: 1, kind: input, shape index: {}]
  %s2 = inlined_call_operand.vmem [shape: f32[1,32], index: 2, kind: input, shape index: {}]
  %s3 = inlined_call_operand.vmem [shape: f32[16,128], index: 3, kind: input, shape index: {}]
  %s4 = inlined_call_operand.vmem [shape: f32[32,128], index: 4, kind: input, shape index: {}]
  %s5 = inlined_call_operand.vmem [shape: f32[1,128], index: 5, kind: input, shape index: {}]
  %s6 = inlined_call_operand.vmem [shape: f32[32,128], index: 6, kind: input, shape index: {}]
  %s7 = inlined_call_operand.vmem [shape: f32[1,128], index: 7, kind: input, shape index: {}]
  %s8 = inlined_call_operand.hbm [shape: f32[8,128], index: 8, kind: output, shape index: {0}]
  %s9 = inlined_call_operand.hbm [shape: f32[1,32], index: 9, kind: output, shape index: {1}]
  %s10 = inlined_call_operand.hbm [shape: f32[1,32], index: 10, kind: output, shape index: {2}]
  %11 = xla_tuple %s8, %s9, %s10
  %s12 = sld [smem:[#allocation0]]
  $region58: #{_forward_impl.1} parent=0
    _
  %s14 = ssub.s32 1, %s12
  %s15 = scalar_select 0, %s14, %s12
  $region1: #{_forward_impl.1} parent=0
    #allocation2 [shape = 'u8[4096]{0}', space=vmem, size = 0x1000, scoped, tag = 'output window, operand 0, single buffered']
    #allocation3 [shape = 's32[1]{0}', space=sflag, size = 0x4, scoped, tag = 'scoped memory for _forward_impl.1']
    #allocation4 [shape = 'u8[512]{0}', space=vmem, size = 0x400, scoped, tag = 'output window, operand 1, single buffered']
    #allocation5 [shape = 's32[1]{0}', space=sflag, size = 0x4, scoped, tag = 'scoped memory for _forward_impl.1']
    #allocation6 [shape = 'u8[512]{0}', space=vmem, size = 0x400, scoped, tag = 'output window, operand 2, single buffered']
    %16 = vsyncpa [#allocation3], 0
    %17 = vsyncpa [#allocation5], 0
    // Predicated region
    $region2: #{_forward_impl.1} parent=1 // pred_check
      _
    $region3: #{_forward_impl.1} parent=1 // pred_check_branch
      %19 = sbr.rel (0) target = $region5
    $region4: #{_forward_impl.1} parent=1 // pred_region
      _
    $region5: #{_forward_impl.1} parent=1 // pred_fallthru
      _
    // Predicated region
    $region6: #{_forward_impl.1} parent=1 // pred_check
      _
    $region7: #{_forward_impl.1} parent=1 // pred_check_branch
      %21 = sbr.rel (0) target = $region9
    $region8: #{_forward_impl.1} parent=1 // pred_region
      _
    $region9: #{_forward_impl.1} parent=1 // pred_fallthru
      _
    // Predicated region
    $region10: #{_forward_impl.1} parent=1 // pred_check
      _
    $region11: #{_forward_impl.1} parent=1 // pred_check_branch
      %23 = sbr.rel (0) target = $region13
    $region12: #{_forward_impl.1} parent=1 // pred_region
      _
    $region13: #{_forward_impl.1} parent=1 // pred_fallthru
      _
    // Predicated region
    $region14: #{_forward_impl.1} parent=1 // pred_check
      _
    $region15: #{_forward_impl.1} parent=1 // pred_check_branch
      %25 = sbr.rel (0) target = $region17
    $region16: #{_forward_impl.1} parent=1 // pred_region
      _
    $region17: #{_forward_impl.1} parent=1 // pred_fallthru
      _
    // Predicated region
    $region18: #{_forward_impl.1} parent=1 // pred_check
      _
    $region19: #{_forward_impl.1} parent=1 // pred_check_branch
      %27 = sbr.rel (0) target = $region21
    $region20: #{_forward_impl.1} parent=1 // pred_region
      _
    $region21: #{_forward_impl.1} parent=1 // pred_fallthru
      _
    // Predicated region
    $region22: #{_forward_impl.1} parent=1 // pred_check
      _
    $region23: #{_forward_impl.1} parent=1 // pred_check_branch
      %29 = sbr.rel (0) target = $region25
    $region24: #{_forward_impl.1} parent=1 // pred_region
      _
    $region25: #{_forward_impl.1} parent=1 // pred_fallthru
      _
    // Predicated region
    $region26: #{_forward_impl.1} parent=1 // pred_check
      _
    $region27: #{_forward_impl.1} parent=1 // pred_check_branch
      %31 = sbr.rel (0) target = $region29
    $region28: #{_forward_impl.1} parent=1 // pred_region
      _
    $region29: #{_forward_impl.1} parent=1 // pred_fallthru
      _
    // Predicated region
    $region30: #{_forward_impl.1} parent=1 // pred_check
      _
    $region31: #{_forward_impl.1} parent=1 // pred_check_branch
      %33 = sbr.rel (0) target = $region33
    $region32: #{_forward_impl.1} parent=1 // pred_region
      _
    $region33: #{_forward_impl.1} parent=1 // pred_fallthru
      _
    %v34 = vld [vmem:[%s0] sm:$0xff]
    %v35 = vld [vmem:[%s3] sm:$0xff]
    %v36 = vld [vmem:[%s3 + $0x8] sm:$0xff]
    %v37 = vld [vmem:[%s5] sm:$0x1]
    %v39 = vperm.slane %v37, 0
    %vm41 = vcmask 130048
    %v43 = vsel %vm41, %v34, 0
    %45 = vmatpush.msra.mxu0 0.0
    %46 = vmatpush.msra.mxu0 0.0
    %47 = vmatpush.msra.mxu0 0.0
    %48 = vmatpush.msra.mxu0 0.0
    %49 = vmatpush.msra.mxu0 0.0
    %50 = vmatpush.msra.mxu0 0.0
    %51 = vmatpush.msra.mxu0 0.0
    %52 = vmatpush.msra.mxu0 0.0
    %53 = vmatpush.msra.mxu0 0.0
    %54 = vmatpush.msra.mxu0 0.0
    %55 = vmatpush.msra.mxu0 0.0
    %56 = vmatpush.msra.mxu0 0.0
    %57 = vmatpush.msra.mxu0 0.0
    %58 = vmatpush.msra.mxu0 0.0
    %59 = vmatpush.msra.mxu0 %v36
    %60 = vmatpush.msra.mxu0 %v35
    %61 = vmatmul.f32.gmra.mxu0 %v43
    %v62 = vpop.f32.mrf.mxu0
    %v63 = vadd.f32 %v39, %v62
    %64 = vdwg.mxu0
    %v65 = vld [vmem:[%s4] sm:$0xff]
    %v66 = vld [vmem:[%s4 + $0x8] sm:$0xff]
    %v67 = vld [vmem:[%s4 + $0x10] sm:$0xff]
    %v68 = vld [vmem:[%s4 + $0x18] sm:$0xff]
    %v69 = vld [vmem:[%s1] sm:$0x1]
    %v70 = vld [vmem:[%s2] sm:$0x1]
    %vm71 = vcmask 261120
    %v73 = vsel %vm71, %v69, 0
    %75 = vmatpush.msra.mxu0 0.0
    %76 = vmatpush.msra.mxu0 0.0
    %77 = vmatpush.msra.mxu0 0.0
    %78 = vmatpush.msra.mxu0 0.0
    %79 = vmatpush.msra.mxu0 0.0
    %80 = vmatpush.msra.mxu0 0.0
    %81 = vmatpush.msra.mxu0 0.0
    %82 = vmatpush.msra.mxu0 0.0
    %83 = vmatpush.msra.mxu0 0.0
    %84 = vmatpush.msra.mxu0 0.0
    %85 = vmatpush.msra.mxu0 0.0
    %86 = vmatpush.msra.mxu0 0.0
    %87 = vmatpush.msra.mxu0 %v68
    %88 = vmatpush.msra.mxu0 %v67
    %89 = vmatpush.msra.mxu0 %v66
    %90 = vmatpush.msra.mxu0 %v65
    %91 = vmatmul.f32.gmra.mxu0 %v73
    %v92 = vpop.f32.mrf.mxu0
    %v93 = vadd.f32 0.0, %v92
    %94 = vdwg.mxu0
    %v95 = vadd.f32 %v63, %v93
    %v96 = vxor.u32 %v95, 2147483648
    %v97 = vmul.f32 %v96, 1.442695
    %v98 = vpow.pop %v97
    %v99 = vadd.f32 %v98, 1.0
    %v100 = vrcp.pop %v99
    %v101 = vmul.f32 %v99, %v100
    %v102 = vsub.f32 1.0, %v101
    %v103 = vmul.f32 %v100, %v102
    %v104 = vadd.f32 %v100, %v103
    %vm105 = vweird.f32 %v99
    %vm106 = vweird.f32 %v100
    %vm107 = vmor %vm105, %vm106
    %v108 = vsel %vm107, %v100, %v104
    %v109 = vand.u32 2147483647, %v99
    %vm110 = vcmp.eq.f32.partialorder %v109, 8.507059e+37
    %v111 = vand.u32 %v99, 2147483648
    %v112 = vor.u32 1.1754944e-38, %v111
    %v113 = vsel %vm110, %v112, %v108
    %v114 = vmul.f32 1.0, %v113
    %v115 = vtanh.pop %v95
    %v116 = vmul.f32 %v114, %v70
    %118 = vrot.lane.b32.xlu0 %v115, 64
    %v119 = vpop.permute.xlu0 %118
    %v121 = vmul.f32 %v114, %v119
    %123 = vrot.lane.b32.xlu0 %v121, 96
    %v124 = vpop.permute.xlu0 %123
    %v126 = vadd.f32 %v116, %v124
    %v127 = vtanh.pop %v126
    %129 = vrot.lane.b32.xlu0 %v127, 64
    %v130 = vpop.permute.xlu0 %129
    %v132 = vmul.f32 %v114, %v130
    %134 = vrot.lane.b32.xlu0 %v132, 64
    %v135 = vpop.permute.xlu0 %134
    %v136 = vsel %vm71, %v135, 0
    %138 = vmatpush.msra.mxu0 0.0
    %139 = vmatpush.msra.mxu0 0.0
    %140 = vmatpush.msra.mxu0 0.0
    %141 = vmatpush.msra.mxu0 0.0
    %142 = vmatpush.msra.mxu0 0.0
    %143 = vmatpush.msra.mxu0 0.0
    %144 = vmatpush.msra.mxu0 0.0
    %145 = vmatpush.msra.mxu0 0.0
    %146 = vmatpush.msra.mxu0 0.0
    %147 = vmatpush.msra.mxu0 0.0
    %148 = vmatpush.msra.mxu0 0.0
    %149 = vmatpush.msra.mxu0 0.0
    %150 = vmatpush.msra.mxu0 %v68
    %151 = vmatpush.msra.mxu0 %v67
    %152 = vmatpush.msra.mxu0 %v66
    %153 = vmatpush.msra.mxu0 %v65
    %154 = vmatmul.f32.gmra.mxu0 %v136
    %v155 = vpop.f32.mrf.mxu0
    %v156 = vadd.f32 0.0, %v155
    %157 = vdwg.mxu0
    %v159 = vrot.slane %v156, 7
    %v161 = vadd.f32 %v63, %v159
    %v162 = vxor.u32 %v161, 2147483648
    %v163 = vmul.f32 %v162, 1.442695
    %v164 = vpow.pop %v163
    %v165 = vadd.f32 %v164, 1.0
    %v166 = vrcp.pop %v165
    %v167 = vmul.f32 %v165, %v166
    %v168 = vsub.f32 1.0, %v167
    %v169 = vmul.f32 %v166, %v168
    %v170 = vadd.f32 %v166, %v169
    %vm171 = vweird.f32 %v165
    %vm172 = vweird.f32 %v166
    %vm173 = vmor %vm171, %vm172
    %v174 = vsel %vm173, %v166, %v170
    %v175 = vand.u32 2147483647, %v165
    %vm176 = vcmp.eq.f32.partialorder %v175, 8.507059e+37
    %v177 = vand.u32 %v165, 2147483648
    %v178 = vor.u32 1.1754944e-38, %v177
    %v179 = vsel %vm176, %v178, %v174
    %v180 = vmul.f32 1.0, %v179
    %v181 = vtanh.pop %v161
    %v183 = vrot.slane %v126, 7
    %v185 = vmul.f32 %v180, %v183
    %187 = vrot.lane.b32.xlu0 %v181, 64
    %v188 = vpop.permute.xlu0 %187
    %v190 = vmul.f32 %v180, %v188
    %192 = vrot.lane.b32.xlu0 %v190, 96
    %v193 = vpop.permute.xlu0 %192
    %v195 = vadd.f32 %v185, %v193
    %v196 = vtanh.pop %v195
    %198 = vrot.lane.b32.xlu0 %v196, 64
    %v199 = vpop.permute.xlu0 %198
    %v201 = vmul.f32 %v180, %v199
    %v203 = vrot.slane %v201, 1
    %204 = vrot.lane.b32.xlu0 %v203, 64
    %v205 = vpop.permute.xlu0 %204
    %v206 = vsel %vm71, %v205, 0
    %208 = vmatpush.msra.mxu0 0.0
    %209 = vmatpush.msra.mxu0 0.0
    %210 = vmatpush.msra.mxu0 0.0
    %211 = vmatpush.msra.mxu0 0.0
    %212 = vmatpush.msra.mxu0 0.0
    %213 = vmatpush.msra.mxu0 0.0
    %214 = vmatpush.msra.mxu0 0.0
    %215 = vmatpush.msra.mxu0 0.0
    %216 = vmatpush.msra.mxu0 0.0
    %217 = vmatpush.msra.mxu0 0.0
    %218 = vmatpush.msra.mxu0 0.0
    %219 = vmatpush.msra.mxu0 0.0
    %220 = vmatpush.msra.mxu0 %v68
    %221 = vmatpush.msra.mxu0 %v67
    %222 = vmatpush.msra.mxu0 %v66
    %223 = vmatpush.msra.mxu0 %v65
    %224 = vmatmul.f32.gmra.mxu0 %v206
    %v225 = vpop.f32.mrf.mxu0
    %v226 = vadd.f32 0.0, %v225
    %227 = vdwg.mxu0
    %v229 = vrot.slane %v226, 6
    %v231 = vadd.f32 %v63, %v229
    %v232 = vxor.u32 %v231, 2147483648
    %v233 = vmul.f32 %v232, 1.442695
    %v234 = vpow.pop %v233
    %v235 = vadd.f32 %v234, 1.0
    %v236 = vrcp.pop %v235
    %v237 = vmul.f32 %v235, %v236
    %v238 = vsub.f32 1.0, %v237
    %v239 = vmul.f32 %v236, %v238
    %v240 = vadd.f32 %v236, %v239
    %vm241 = vweird.f32 %v235
    %vm242 = vweird.f32 %v236
    %vm243 = vmor %vm241, %vm242
    %v244 = vsel %vm243, %v236, %v240
    %v245 = vand.u32 2147483647, %v235
    %vm246 = vcmp.eq.f32.partialorder %v245, 8.507059e+37
    %v247 = vand.u32 %v235, 2147483648
    %v248 = vor.u32 1.1754944e-38, %v247
    %v249 = vsel %vm246, %v248, %v244
    %v250 = vmul.f32 1.0, %v249
    %v251 = vtanh.pop %v231
    %v253 = vrot.slane %v195, 7
    %v255 = vmul.f32 %v250, %v253
    %257 = vrot.lane.b32.xlu0 %v251, 64
    %v258 = vpop.permute.xlu0 %257
    %v260 = vmul.f32 %v250, %v258
    %262 = vrot.lane.b32.xlu0 %v260, 96
    %v263 = vpop.permute.xlu0 %262
    %v265 = vadd.f32 %v255, %v263
    %v266 = vtanh.pop %v265
    %268 = vrot.lane.b32.xlu0 %v266, 64
    %v269 = vpop.permute.xlu0 %268
    %v271 = vmul.f32 %v250, %v269
    %v273 = vrot.slane %v271, 2
    %274 = vrot.lane.b32.xlu0 %v273, 64
    %v275 = vpop.permute.xlu0 %274
    %v276 = vsel %vm71, %v275, 0
    %278 = vmatpush.msra.mxu0 0.0
    %279 = vmatpush.msra.mxu0 0.0
    %280 = vmatpush.msra.mxu0 0.0
    %281 = vmatpush.msra.mxu0 0.0
    %282 = vmatpush.msra.mxu0 0.0
    %283 = vmatpush.msra.mxu0 0.0
    %284 = vmatpush.msra.mxu0 0.0
    %285 = vmatpush.msra.mxu0 0.0
    %286 = vmatpush.msra.mxu0 0.0
    %287 = vmatpush.msra.mxu0 0.0
    %288 = vmatpush.msra.mxu0 0.0
    %289 = vmatpush.msra.mxu0 0.0
    %290 = vmatpush.msra.mxu0 %v68
    %291 = vmatpush.msra.mxu0 %v67
    %292 = vmatpush.msra.mxu0 %v66
    %293 = vmatpush.msra.mxu0 %v65
    %294 = vmatmul.f32.gmra.mxu0 %v276
    %v295 = vpop.f32.mrf.mxu0
    %v296 = vadd.f32 0.0, %v295
    %297 = vdwg.mxu0
    %v299 = vrot.slane %v296, 5
    %v301 = vadd.f32 %v63, %v299
    %v302 = vxor.u32 %v301, 2147483648
    %v303 = vmul.f32 %v302, 1.442695
    %v304 = vpow.pop %v303
    %v305 = vadd.f32 %v304, 1.0
    %v306 = vrcp.pop %v305
    %v307 = vmul.f32 %v305, %v306
    %v308 = vsub.f32 1.0, %v307
    %v309 = vmul.f32 %v306, %v308
    %v310 = vadd.f32 %v306, %v309
    %vm311 = vweird.f32 %v305
    %vm312 = vweird.f32 %v306
    %vm313 = vmor %vm311, %vm312
    %v314 = vsel %vm313, %v306, %v310
    %v315 = vand.u32 2147483647, %v305
    %vm316 = vcmp.eq.f32.partialorder %v315, 8.507059e+37
    %v317 = vand.u32 %v305, 2147483648
    %v318 = vor.u32 1.1754944e-38, %v317
    %v319 = vsel %vm316, %v318, %v314
    %v320 = vmul.f32 1.0, %v319
    %v321 = vtanh.pop %v301
    %v323 = vrot.slane %v265, 7
    %v325 = vmul.f32 %v320, %v323
    %327 = vrot.lane.b32.xlu0 %v321, 64
    %v328 = vpop.permute.xlu0 %327
    %v330 = vmul.f32 %v320, %v328
    %332 = vrot.lane.b32.xlu0 %v330, 96
    %v333 = vpop.permute.xlu0 %332
    %v335 = vadd.f32 %v325, %v333
    %v336 = vtanh.pop %v335
    %338 = vrot.lane.b32.xlu0 %v336, 64
    %v339 = vpop.permute.xlu0 %338
    %v341 = vmul.f32 %v320, %v339
    %v343 = vrot.slane %v341, 3
    %344 = vrot.lane.b32.xlu0 %v343, 64
    %v345 = vpop.permute.xlu0 %344
    %v346 = vsel %vm71, %v345, 0
    %348 = vmatpush.msra.mxu0 0.0
    %349 = vmatpush.msra.mxu0 0.0
    %350 = vmatpush.msra.mxu0 0.0
    %351 = vmatpush.msra.mxu0 0.0
    %352 = vmatpush.msra.mxu0 0.0
    %353 = vmatpush.msra.mxu0 0.0
    %354 = vmatpush.msra.mxu0 0.0
    %355 = vmatpush.msra.mxu0 0.0
    %356 = vmatpush.msra.mxu0 0.0
    %357 = vmatpush.msra.mxu0 0.0
    %358 = vmatpush.msra.mxu0 0.0
    %359 = vmatpush.msra.mxu0 0.0
    %360 = vmatpush.msra.mxu0 %v68
    %361 = vmatpush.msra.mxu0 %v67
    %362 = vmatpush.msra.mxu0 %v66
    %363 = vmatpush.msra.mxu0 %v65
    %364 = vmatmul.f32.gmra.mxu0 %v346
    %v365 = vpop.f32.mrf.mxu0
    %v366 = vadd.f32 0.0, %v365
    %367 = vdwg.mxu0
    %v369 = vrot.slane %v366, 4
    %v371 = vadd.f32 %v63, %v369
    %v372 = vxor.u32 %v371, 2147483648
    %v373 = vmul.f32 %v372, 1.442695
    %v374 = vpow.pop %v373
    %v375 = vadd.f32 %v374, 1.0
    %v376 = vrcp.pop %v375
    %v377 = vmul.f32 %v375, %v376
    %v378 = vsub.f32 1.0, %v377
    %v379 = vmul.f32 %v376, %v378
    %v380 = vadd.f32 %v376, %v379
    %vm381 = vweird.f32 %v375
    %vm382 = vweird.f32 %v376
    %vm383 = vmor %vm381, %vm382
    %v384 = vsel %vm383, %v376, %v380
    %v385 = vand.u32 2147483647, %v375
    %vm386 = vcmp.eq.f32.partialorder %v385, 8.507059e+37
    %v387 = vand.u32 %v375, 2147483648
    %v388 = vor.u32 1.1754944e-38, %v387
    %v389 = vsel %vm386, %v388, %v384
    %v390 = vmul.f32 1.0, %v389
    %v391 = vtanh.pop %v371
    %v393 = vrot.slane %v335, 7
    %v395 = vmul.f32 %v390, %v393
    %397 = vrot.lane.b32.xlu0 %v391, 64
    %v398 = vpop.permute.xlu0 %397
    %v400 = vmul.f32 %v390, %v398
    %402 = vrot.lane.b32.xlu0 %v400, 96
    %v403 = vpop.permute.xlu0 %402
    %v405 = vadd.f32 %v395, %v403
    %v406 = vtanh.pop %v405
    %408 = vrot.lane.b32.xlu0 %v406, 64
    %v409 = vpop.permute.xlu0 %408
    %v411 = vmul.f32 %v390, %v409
    %v413 = vrot.slane %v411, 4
    %414 = vrot.lane.b32.xlu0 %v413, 64
    %v415 = vpop.permute.xlu0 %414
    %v416 = vsel %vm71, %v415, 0
    %418 = vmatpush.msra.mxu0 0.0
    %419 = vmatpush.msra.mxu0 0.0
    %420 = vmatpush.msra.mxu0 0.0
    %421 = vmatpush.msra.mxu0 0.0
    %422 = vmatpush.msra.mxu0 0.0
    %423 = vmatpush.msra.mxu0 0.0
    %424 = vmatpush.msra.mxu0 0.0
    %425 = vmatpush.msra.mxu0 0.0
    %426 = vmatpush.msra.mxu0 0.0
    %427 = vmatpush.msra.mxu0 0.0
    %428 = vmatpush.msra.mxu0 0.0
    %429 = vmatpush.msra.mxu0 0.0
    %430 = vmatpush.msra.mxu0 %v68
    %431 = vmatpush.msra.mxu0 %v67
    %432 = vmatpush.msra.mxu0 %v66
    %433 = vmatpush.msra.mxu0 %v65
    %434 = vmatmul.f32.gmra.mxu0 %v416
    %v435 = vpop.f32.mrf.mxu0
    %v436 = vadd.f32 0.0, %v435
    %437 = vdwg.mxu0
    %v439 = vrot.slane %v436, 3
    %v441 = vadd.f32 %v63, %v439
    %v442 = vxor.u32 %v441, 2147483648
    %v443 = vmul.f32 %v442, 1.442695
    %v444 = vpow.pop %v443
    %v445 = vadd.f32 %v444, 1.0
    %v446 = vrcp.pop %v445
    %v447 = vmul.f32 %v445, %v446
    %v448 = vsub.f32 1.0, %v447
    %v449 = vmul.f32 %v446, %v448
    %v450 = vadd.f32 %v446, %v449
    %vm451 = vweird.f32 %v445
    %vm452 = vweird.f32 %v446
    %vm453 = vmor %vm451, %vm452
    %v454 = vsel %vm453, %v446, %v450
    %v455 = vand.u32 2147483647, %v445
    %vm456 = vcmp.eq.f32.partialorder %v455, 8.507059e+37
    %v457 = vand.u32 %v445, 2147483648
    %v458 = vor.u32 1.1754944e-38, %v457
    %v459 = vsel %vm456, %v458, %v454
    %v460 = vmul.f32 1.0, %v459
    %v461 = vtanh.pop %v441
    %v463 = vrot.slane %v405, 7
    %v465 = vmul.f32 %v460, %v463
    %467 = vrot.lane.b32.xlu0 %v461, 64
    %v468 = vpop.permute.xlu0 %467
    %v470 = vmul.f32 %v460, %v468
    %472 = vrot.lane.b32.xlu0 %v470, 96
    %v473 = vpop.permute.xlu0 %472
    %v475 = vadd.f32 %v465, %v473
    %v476 = vtanh.pop %v475
    %478 = vrot.lane.b32.xlu0 %v476, 64
    %v479 = vpop.permute.xlu0 %478
    %v481 = vmul.f32 %v460, %v479
    %v483 = vrot.slane %v481, 5
    %484 = vrot.lane.b32.xlu0 %v483, 64
    %v485 = vpop.permute.xlu0 %484
    %v486 = vsel %vm71, %v485, 0
    %488 = vmatpush.msra.mxu0 0.0
    %489 = vmatpush.msra.mxu0 0.0
    %490 = vmatpush.msra.mxu0 0.0
    %491 = vmatpush.msra.mxu0 0.0
    %492 = vmatpush.msra.mxu0 0.0
    %493 = vmatpush.msra.mxu0 0.0
    %494 = vmatpush.msra.mxu0 0.0
    %495 = vmatpush.msra.mxu0 0.0
    %496 = vmatpush.msra.mxu0 0.0
    %497 = vmatpush.msra.mxu0 0.0
    %498 = vmatpush.msra.mxu0 0.0
    %499 = vmatpush.msra.mxu0 0.0
    %500 = vmatpush.msra.mxu0 %v68
    %501 = vmatpush.msra.mxu0 %v67
    %502 = vmatpush.msra.mxu0 %v66
    %503 = vmatpush.msra.mxu0 %v65
    %504 = vmatmul.f32.gmra.mxu0 %v486
    %v505 = vpop.f32.mrf.mxu0
    %v506 = vadd.f32 0.0, %v505
    %507 = vdwg.mxu0
    %v509 = vrot.slane %v506, 2
    %v511 = vadd.f32 %v63, %v509
    %v512 = vxor.u32 %v511, 2147483648
    %v513 = vmul.f32 %v512, 1.442695
    %v514 = vpow.pop %v513
    %v515 = vadd.f32 %v514, 1.0
    %v516 = vrcp.pop %v515
    %v517 = vmul.f32 %v515, %v516
    %v518 = vsub.f32 1.0, %v517
    %v519 = vmul.f32 %v516, %v518
    %v520 = vadd.f32 %v516, %v519
    %vm521 = vweird.f32 %v515
    %vm522 = vweird.f32 %v516
    %vm523 = vmor %vm521, %vm522
    %v524 = vsel %vm523, %v516, %v520
    %v525 = vand.u32 2147483647, %v515
    %vm526 = vcmp.eq.f32.partialorder %v525, 8.507059e+37
    %v527 = vand.u32 %v515, 2147483648
    %v528 = vor.u32 1.1754944e-38, %v527
    %v529 = vsel %vm526, %v528, %v524
    %v530 = vmul.f32 1.0, %v529
    %v531 = vtanh.pop %v511
    %v533 = vrot.slane %v475, 7
    %v535 = vmul.f32 %v530, %v533
    %537 = vrot.lane.b32.xlu0 %v531, 64
    %v538 = vpop.permute.xlu0 %537
    %v540 = vmul.f32 %v530, %v538
    %542 = vrot.lane.b32.xlu0 %v540, 96
    %v543 = vpop.permute.xlu0 %542
    %v545 = vadd.f32 %v535, %v543
    %v546 = vtanh.pop %v545
    %548 = vrot.lane.b32.xlu0 %v546, 64
    %v549 = vpop.permute.xlu0 %548
    %v551 = vmul.f32 %v530, %v549
    %v553 = vrot.slane %v551, 6
    %554 = vrot.lane.b32.xlu0 %v553, 64
    %v555 = vpop.permute.xlu0 %554
    %v556 = vsel %vm71, %v555, 0
    %558 = vmatpush.msra.mxu0 0.0
    %559 = vmatpush.msra.mxu0 0.0
    %560 = vmatpush.msra.mxu0 0.0
    %561 = vmatpush.msra.mxu0 0.0
    %562 = vmatpush.msra.mxu0 0.0
    %563 = vmatpush.msra.mxu0 0.0
    %564 = vmatpush.msra.mxu0 0.0
    %565 = vmatpush.msra.mxu0 0.0
    %566 = vmatpush.msra.mxu0 0.0
    %567 = vmatpush.msra.mxu0 0.0
    %568 = vmatpush.msra.mxu0 0.0
    %569 = vmatpush.msra.mxu0 0.0
    %570 = vmatpush.msra.mxu0 %v68
    %571 = vmatpush.msra.mxu0 %v67
    %572 = vmatpush.msra.mxu0 %v66
    %573 = vmatpush.msra.mxu0 %v65
    %574 = vmatmul.f32.gmra.mxu0 %v556
    %v575 = vpop.f32.mrf.mxu0
    %v576 = vadd.f32 0.0, %v575
    %577 = vdwg.mxu0
    %v579 = vrot.slane %v576, 1
    %v581 = vadd.f32 %v63, %v579
    %v582 = vxor.u32 %v581, 2147483648
    %v583 = vmul.f32 %v582, 1.442695
    %v584 = vpow.pop %v583
    %v585 = vadd.f32 %v584, 1.0
    %v586 = vrcp.pop %v585
    %v587 = vmul.f32 %v585, %v586
    %v588 = vsub.f32 1.0, %v587
    %v589 = vmul.f32 %v586, %v588
    %v590 = vadd.f32 %v586, %v589
    %vm591 = vweird.f32 %v585
    %vm592 = vweird.f32 %v586
    %vm593 = vmor %vm591, %vm592
    %v594 = vsel %vm593, %v586, %v590
    %v595 = vand.u32 2147483647, %v585
    %vm596 = vcmp.eq.f32.partialorder %v595, 8.507059e+37
    %v597 = vand.u32 %v585, 2147483648
    %v598 = vor.u32 1.1754944e-38, %v597
    %v599 = vsel %vm596, %v598, %v594
    %v600 = vmul.f32 1.0, %v599
    %v601 = vtanh.pop %v581
    %v603 = vrot.slane %v545, 7
    %v605 = vmul.f32 %v600, %v603
    %607 = vrot.lane.b32.xlu0 %v601, 64
    %v608 = vpop.permute.xlu0 %607
    %v610 = vmul.f32 %v600, %v608
    %612 = vrot.lane.b32.xlu0 %v610, 96
    %v613 = vpop.permute.xlu0 %612
    %v615 = vadd.f32 %v605, %v613
    %v616 = vtanh.pop %v615
    %618 = vrot.lane.b32.xlu0 %v616, 64
    %v619 = vpop.permute.xlu0 %618
    %v621 = vmul.f32 %v600, %v619
    %623 = vrot.lane.b32.xlu0 %v621, 64
    %v624 = vpop.permute.xlu0 %623
    %vm626 = vcmask 261127
    %627 = vst.msk [vmem:[#allocation4 - $0x7] sm:$0x80] %vm626, %v624
    %628 = vst.msk [vmem:[#allocation6 - $0x7] sm:$0x80] %vm626, %v615
    %vm629 = vcmask 1040384
    %v630 = vsel %vm629, %v132, %v201
    %vm631 = vcmask 1041408
    %v632 = vsel %vm631, %v630, %v271
    %vm633 = vcmask 1042432
    %v634 = vsel %vm633, %v632, %v341
    %vm635 = vcmask 1043456
    %v636 = vsel %vm635, %v634, %v411
    %vm637 = vcmask 1044480
    %v638 = vsel %vm637, %v636, %v481
    %vm639 = vcmask 1045504
    %v640 = vsel %vm639, %v638, %v551
    %vm641 = vcmask 1046528
    %v642 = vsel %vm641, %v640, %v621
    %v643 = vld [vmem:[%s6] sm:$0xff]
    %v644 = vld [vmem:[%s6 + $0x8] sm:$0xff]
    %v645 = vld [vmem:[%s6 + $0x10] sm:$0xff]
    %v646 = vld [vmem:[%s6 + $0x18] sm:$0xff]
    %v647 = vld [vmem:[%s7] sm:$0x1]
    %v649 = vperm.slane %v647, 0
    %652 = vrot.lane.b32.xlu0 %v642, 64
    %v653 = vpop.permute.xlu0 %652
    %v654 = vsel %vm71, %v653, 0
    %656 = vmatpush.msra.mxu0 0.0
    %657 = vmatpush.msra.mxu0 0.0
    %658 = vmatpush.msra.mxu0 0.0
    %659 = vmatpush.msra.mxu0 0.0
    %660 = vmatpush.msra.mxu0 0.0
    %661 = vmatpush.msra.mxu0 0.0
    %662 = vmatpush.msra.mxu0 0.0
    %663 = vmatpush.msra.mxu0 0.0
    %664 = vmatpush.msra.mxu0 0.0
    %665 = vmatpush.msra.mxu0 0.0
    %666 = vmatpush.msra.mxu0 0.0
    %667 = vmatpush.msra.mxu0 0.0
    %668 = vmatpush.msra.mxu0 %v646
    %669 = vmatpush.msra.mxu0 %v645
    %670 = vmatpush.msra.mxu0 %v644
    %671 = vmatpush.msra.mxu0 %v643
    %672 = vmatmul.f32.gmra.mxu0 %v654
    %v673 = vpop.f32.mrf.mxu0
    %v674 = vadd.f32 %v649, %v673
    %675 = vdwg.mxu0
    %676 = vst [vmem:[#allocation2] sm:$0xff] %v674
    // Predicated region
    $region34: #{_forward_impl.1} parent=1 // pred_check
      _
    $region35: #{_forward_impl.1} parent=1 // pred_check_branch
      %678 = sbr.rel (0) target = $region37
    $region36: #{_forward_impl.1} parent=1 // pred_region
      %680 = vsyncadd [#allocation3], 0
      %s682 = sshll.u32 [#allocation2], 4
      %s683 = int_to_ptr.vmem [resolvable:$true] %s682
      %s684 = sshll.u32 %s8, 4
      %s685 = int_to_ptr.hbm [resolvable:$true] %s684
      %687 = dma.vmem_to_hbm [thread:$0]  %s683, 128, %s685, [#allocation3]
    $region37: #{_forward_impl.1} parent=1 // pred_fallthru
      _
    // Predicated region
    $region38: #{_forward_impl.1} parent=1 // pred_check
      _
    $region39: #{_forward_impl.1} parent=1 // pred_check_branch
      %689 = sbr.rel (0) target = $region41
    $region40: #{_forward_impl.1} parent=1 // pred_region
      %691 = vsyncadd [#allocation5], 0
      %s693 = sshll.u32 [#allocation4], 4
      %s694 = int_to_ptr.vmem [resolvable:$true] %s693
      %s695 = sshll.u32 %s9, 4
      %s696 = int_to_ptr.hbm [resolvable:$true] %s695
      %698 = dma.vmem_to_hbm [thread:$0]  %s694, 16, %s696, [#allocation5]
    $region41: #{_forward_impl.1} parent=1 // pred_fallthru
      _
    // Predicated region
    $region42: #{_forward_impl.1} parent=1 // pred_check
      _
    $region43: #{_forward_impl.1} parent=1 // pred_check_branch
      %700 = sbr.rel (0) target = $region45
    $region44: #{_forward_impl.1} parent=1 // pred_region
      %702 = vsyncadd [#allocation5], 0
      %s704 = sshll.u32 [#allocation6], 4
      %s705 = int_to_ptr.vmem [resolvable:$true] %s704
      %s706 = sshll.u32 %s10, 4
      %s707 = int_to_ptr.hbm [resolvable:$true] %s706
      %709 = dma.vmem_to_hbm [thread:$0]  %s705, 16, %s707, [#allocation5]
    $region45: #{_forward_impl.1} parent=1 // pred_fallthru
      _
    // Predicated region
    $region46: #{_forward_impl.1} parent=1 // pred_check
      _
    $region47: #{_forward_impl.1} parent=1 // pred_check_branch
      %711 = sbr.rel (0) target = $region49
    $region48: #{_forward_impl.1} parent=1 // pred_region
      %713 = dma.done [#allocation3], 128
    $region49: #{_forward_impl.1} parent=1 // pred_fallthru
      _
    // Predicated region
    $region50: #{_forward_impl.1} parent=1 // pred_check
      _
    $region51: #{_forward_impl.1} parent=1 // pred_check_branch
      %715 = sbr.rel (0) target = $region53
    $region52: #{_forward_impl.1} parent=1 // pred_region
      %717 = dma.done [#allocation5], 16
    $region53: #{_forward_impl.1} parent=1 // pred_fallthru
      _
    // Predicated region
    $region54: #{_forward_impl.1} parent=1 // pred_check
      _
    $region55: #{_forward_impl.1} parent=1 // pred_check_branch
      %719 = sbr.rel (0) target = $region57
    $region56: #{_forward_impl.1} parent=1 // pred_region
      %721 = dma.done [#allocation5], 16
    $region57: #{_forward_impl.1} parent=1 // pred_fallthru
      _
    %722 = vsyncpa [#allocation3], 1
    %723 = vsyncpa [#allocation5], 1

</llo_original>
